<compile_context>
chip_gen: v5e
topology: v5e:2x2
jax: 0.10.0
libtpu: 0.0.40
codegen_flags: <defaults>
</compile_context>

<pallas_src>
import numpy as np
import jax
import jax.numpy as jnp
from jax.experimental import pallas as pl
from jax.experimental.pallas import tpu as pltpu


# --------------------------------------------------------------------------
# generation-aware budgets
# --------------------------------------------------------------------------
def _tpu_vmem_bytes():
    try:
        v = int(getattr(pltpu.get_tpu_info(), "vmem_capacity_bytes", 0))
        if v >= (16 << 20):
            return v
    except Exception:
        pass
    return 64 << 20            # v7x-safe fallback (smallest current per-core VMEM)


def _hbm_alpha():
    """Approx. bf16 MXU flops per HBM byte, used to weight intermediate-tensor
    HBM round trips in the conv-first / resize-first ordering heuristic."""
    try:
        name = str(getattr(pltpu.get_tpu_info(), "chip_version", "")).lower()
        if "v5" in name:
            return 240.0
        if name:
            return 620.0
    except Exception:
        pass
    return 500.0


_VMEM_PHYS = _tpu_vmem_bytes()
_VMEM_LIMIT = min(int(_VMEM_PHYS * 3 // 4), 96 << 20)   # scoped-vmem limit per kernel
_TILE_BUDGET = _VMEM_LIMIT // 3                          # per-kernel working-set budget
_KRON_BUDGET = min(_TILE_BUDGET // 2, 8 << 20)           # max bytes of kron(Mh, Mw) operator


# --------------------------------------------------------------------------
# half-pixel (align_corners=False) bilinear interpolation operators
# --------------------------------------------------------------------------
def _bilinear_matrix_np(in_size: int, out_size: int) -> np.ndarray:
    """(out_size, in_size) float64 matrix M such that y = M @ x matches
    F.interpolate(mode='bilinear', align_corners=False) along one axis."""
    scale = in_size / out_size
    dst = np.arange(out_size, dtype=np.float64)
    src = np.maximum((dst + 0.5) * scale - 0.5, 0.0)     # PyTorch clamps negative src idx
    i0 = np.minimum(np.floor(src).astype(np.int64), in_size - 1)
    i1 = np.minimum(i0 + 1, in_size - 1)
    lam = src - i0
    M = np.zeros((out_size, in_size), dtype=np.float64)
    rows = np.arange(out_size)
    M[rows, i0] += 1.0 - lam
    M[rows, i1] += lam
    return M


def make_bilinear_matrix(in_size: int, out_size: int) -> jnp.ndarray:
    return jnp.asarray(_bilinear_matrix_np(in_size, out_size), dtype=jnp.float32)


def _kron_resize_operator_T(h, w, h_out, w_out, dtype):
    """(H*W, H_out*W_out) operator K.T with K = kron(Mh, Mw); out_flat = x_flat @ K.T."""
    K = np.kron(_bilinear_matrix_np(h, h_out), _bilinear_matrix_np(w, w_out))
    return jnp.asarray(K.T, dtype=dtype)


def _use_kron(s_in, s_out, compute_itemsize):
    return s_in * s_out * compute_itemsize <= _KRON_BUDGET


# --------------------------------------------------------------------------
# tiling helpers (all static / trace-time)
# --------------------------------------------------------------------------
def _pick_spatial_tile(hw, n, c_in, c_out, in_isz, out_isz, budget=_TILE_BUDGET):
    """Lane-aligned H*W chunk for the 1x1-conv kernel.  Largest multiple of 128 that
    divides hw and fits the budget, preferring >=4 (then >=2) total grid steps so
    v7x's second TensorCore gets work."""
    if hw % 128:
        return hw    # TODO(synk): pad hw to a 128 multiple instead of one full block
    # double-buffered in/out blocks per lane + f32 matmul result
    per_lane = 2 * (in_isz * c_in + out_isz * c_out) + 4 * c_out
    s_max = max(128, (budget // max(per_lane, 1)) // 128 * 128)
    cands = [t for t in range(128, min(s_max, hw) + 1, 128) if hw % t == 0]
    if not cands:
        return hw

    def steps(t):
        return n * (hw // t)

    for min_steps, min_tile in ((4, 256), (2, 128), (1, 128)):
        ok = [t for t in cands if steps(t) >= min_steps and t >= min_tile]
        if ok:
            return max(ok)
    return max(cands)


def _pick_plane_group_kron(nc, s_in, s_out, in_isz, out_isz, budget=_TILE_BUDGET):
    """Planes per grid step for the Kronecker resize kernel.  The (g, S) block layout
    needs g % 8 == 0 (or g == nc); prefer >=4 grid steps, then the biggest block."""
    per_plane = 2 * (in_isz * s_in + out_isz * s_out) + 4 * (s_in + s_out)
    gmax = max(1, budget // max(per_plane, 1))
    cands = [g for g in range(8, min(gmax, nc) + 1, 8) if nc % g == 0]
    if not cands:
        return nc
    for min_steps in (4, 2, 1):
        ok = [g for g in cands if nc // g >= min_steps]
        if ok:
            return max(ok)
    return max(cands)


def _pick_plane_group_sep(nc, h, w, h_out, w_out, in_isz, out_isz, budget=_TILE_BUDGET):
    """Planes per grid step for the separable resize fallback (3-D blocks, leading
    dim unconstrained).  Accounts for double-buffered blocks + f32/bf16 temporaries."""
    per_plane = (2 * in_isz * h * w + 2 * out_isz * h_out * w_out
                 + 6 * h * w_out + 4 * h_out * w_out)
    gmax = max(1, min(budget // max(per_plane, 1), nc))
    cands = [g for g in range(1, gmax + 1) if nc % g == 0]
    for min_steps in (4, 2, 1):
        ok = [g for g in cands if nc // g >= min_steps]
        if ok:
            return max(ok)
    return 1


def _pick_cout_tile(c_t, n, s_in, s_out, out_isz, budget=_TILE_BUDGET):
    """Output-channel tile for the fused (conv-first) kernel: multiple of 8 dividing
    C_t, bounded by VMEM, preferring >=4 grid steps."""
    per_ch = 2 * out_isz * s_out + 4 * (s_in + s_out)
    tmax = max(1, budget // max(per_ch, 1))
    cands = [t for t in range(8, min(tmax, c_t) + 1, 8) if c_t % t == 0]
    if not cands:
        return c_t
    for min_steps in (4, 2, 1):
        ok = [t for t in cands if n * (c_t // t) >= min_steps]
        if ok:
            return max(ok)
    return max(cands)


# --------------------------------------------------------------------------
# kernel bodies
# --------------------------------------------------------------------------
def _make_resize_kron_kernel(compute_dtype):
    def kernel(x_ref, kT_ref, o_ref):
        # x_ref: (g, S_in), kT_ref: (S_in, S_out), o_ref: (g, S_out) lane-dense
        o = jnp.dot(x_ref[...].astype(compute_dtype), kT_ref[...],
                    preferred_element_type=jnp.float32)
        o_ref[...] = o.astype(o_ref.dtype)
    return kernel


def _make_resize_sep_kernel(compute_dtype, h_first):
    def kernel(x_ref, mh_ref, mwT_ref, o_ref):
        # x_ref: (g, H, W), mh_ref: (H_out, H), mwT_ref: (W, W_out)
        g, h, w = x_ref.shape
        h_out = mh_ref.shape[0]
        w_out = mwT_ref.shape[1]
        if h_first:
            mh = jnp.broadcast_to(mh_ref[...], (g, h_out, h))
            t = jnp.einsum('goh,ghw->gow', mh, x_ref[...].astype(compute_dtype),
                           preferred_element_type=jnp.float32)           # (g, H_out, W)
            t = t.astype(compute_dtype).reshape(g * h_out, w)
            o = jnp.dot(t, mwT_ref[...], preferred_element_type=jnp.float32)
            o = o.reshape(g, h_out, w_out)
        else:
            x = x_ref[...].astype(compute_dtype).reshape(g * h, w)       # flat W pass
            t = jnp.dot(x, mwT_ref[...], preferred_element_type=jnp.float32)
            t = t.astype(compute_dtype).reshape(g, h, w_out)
            mh = jnp.broadcast_to(mh_ref[...], (g, h_out, h))
            o = jnp.einsum('goh,ghp->gop', mh, t, preferred_element_type=jnp.float32)
        o_ref[...] = o.astype(o_ref.dtype)
    return kernel


def _make_conv1x1_kernel(compute_dtype):
    def kernel(x_ref, w_ref, b_ref, o_ref):
        # x_ref: (C_in, S_tile), w_ref: (C_out, C_in), b_ref: (C_out, 1) f32
        y = jnp.dot(w_ref[...], x_ref[...].astype(compute_dtype),
                    preferred_element_type=jnp.float32)
        o_ref[...] = (y + b_ref[...]).astype(o_ref.dtype)
    return kernel


def _make_fused_kron_kernel(conv_first, compute_dtype):
    def kernel(x_ref, w_ref, b_ref, kT_ref, o_ref):
        # x_ref: (C_in, S_in), w_ref: (tc, C_in), b_ref: (tc, 1) f32,
        # kT_ref: (S_in, S_out), o_ref: (tc, S_out) lane-dense
        x = x_ref[...].astype(compute_dtype)
        w = w_ref[...]
        if conv_first:
            y = jnp.dot(w, x, preferred_element_type=jnp.float32)              # (tc, S_in)
            o = jnp.dot(y.astype(compute_dtype), kT_ref[...],
                        preferred_element_type=jnp.float32)                    # (tc, S_out)
        else:
            r = jnp.dot(x, kT_ref[...], preferred_element_type=jnp.float32)    # (C_in, S_out)
            o = jnp.dot(w, r.astype(compute_dtype),
                        preferred_element_type=jnp.float32)                    # (tc, S_out)
        o_ref[...] = (o + b_ref[...]).astype(o_ref.dtype)
    return kernel


# --------------------------------------------------------------------------
# wrappers
# --------------------------------------------------------------------------
def bilinear_resize_pallas(x, h_out, w_out, compute_dtype=jnp.bfloat16, out_dtype=None):
    """x: (N, C, H, W) -> (N, C, h_out, w_out); bilinear, align_corners=False."""
    N, C, H, W = x.shape
    if out_dtype is None:
        out_dtype = x.dtype
    if (H, W) == (h_out, w_out):
        return x.astype(out_dtype)

    nc = N * C
    s_in, s_out = H * W, h_out * w_out
    in_isz = jnp.dtype(x.dtype).itemsize
    out_isz = jnp.dtype(out_dtype).itemsize
    c_isz = jnp.dtype(compute_dtype).itemsize

    if _use_kron(s_in, s_out, c_isz) and (nc % 8 == 0 or nc <= 512):
        # one lane-dense matmul against the precomputed Kronecker operator
        kT = _kron_resize_operator_T(H, W, h_out, w_out, compute_dtype)
        g = _pick_plane_group_kron(nc, s_in, s_out, in_isz, out_isz)
        out = pl.pallas_call(
            _make_resize_kron_kernel(compute_dtype),
            out_shape=jax.ShapeDtypeStruct((nc, s_out), out_dtype),
            grid=(nc // g,),
            in_specs=[
                pl.BlockSpec((g, s_in), lambda i: (i, 0)),
                pl.BlockSpec((s_in, s_out), lambda i: (0, 0)),
            ],
            out_specs=pl.BlockSpec((g, s_out), lambda i: (i, 0)),
            compiler_params=pltpu.CompilerParams(
                dimension_semantics=("parallel",),
                vmem_limit_bytes=_VMEM_LIMIT),
        )(x.reshape(nc, s_in), kT)
        return out.reshape(N, C, h_out, w_out)

    # separable fallback for large spatial maps: cheaper pass order per shape.
    # TODO(synk): 2-tap gather+lerp VPU path + lane-dense output for this branch.
    h_first = (h_out * W * (H + w_out)) < (H * w_out * (W + h_out))
    mh = jnp.asarray(_bilinear_matrix_np(H, h_out), dtype=compute_dtype)     # (H_out, H)
    mwT = jnp.asarray(_bilinear_matrix_np(W, w_out).T, dtype=compute_dtype)  # (W, W_out)
    g = _pick_plane_group_sep(nc, H, W, h_out, w_out, in_isz, out_isz)
    out = pl.pallas_call(
        _make_resize_sep_kernel(compute_dtype, h_first),
        out_shape=jax.ShapeDtypeStruct((nc, h_out, w_out), out_dtype),
        grid=(nc // g,),
        in_specs=[
            pl.BlockSpec((g, H, W), lambda i: (i, 0, 0)),
            pl.BlockSpec((h_out, H), lambda i: (0, 0)),
            pl.BlockSpec((W, w_out), lambda i: (0, 0)),
        ],
        out_specs=pl.BlockSpec((g, h_out, w_out), lambda i: (i, 0, 0)),
        compiler_params=pltpu.CompilerParams(
            dimension_semantics=("parallel",),
            vmem_limit_bytes=_VMEM_LIMIT),
    )(x.reshape(nc, H, W), mh, mwT)
    return out.reshape(N, C, h_out, w_out)


def conv1x1_pallas(x, weight, bias, compute_dtype=jnp.bfloat16, out_dtype=None):
    """x: (N, C_in, H, W), weight: (C_out, C_in), bias: (C_out,) -> (N, C_out, H, W)."""
    N, C_in, H, W = x.shape
    C_out = weight.shape[0]
    if out_dtype is None:
        out_dtype = x.dtype
    hw = H * W
    in_isz = jnp.dtype(x.dtype).itemsize
    out_isz = jnp.dtype(out_dtype).itemsize
    s_tile = _pick_spatial_tile(hw, N, C_in, C_out, in_isz, out_isz)

    wp = weight.astype(compute_dtype)
    b2 = bias.astype(jnp.float32).reshape(C_out, 1)

    # TODO(synk): pipeline_mode=pl.Buffered(3) on the x spec if profiling shows
    #             exposed DMA on the strided (C_in, s_tile) block.
    out = pl.pallas_call(
        _make_conv1x1_kernel(compute_dtype),
        out_shape=jax.ShapeDtypeStruct((N, C_out, hw), out_dtype),
        grid=(N, hw // s_tile),
        in_specs=[
            pl.BlockSpec((pl.Squeezed(), C_in, s_tile), lambda n, s: (n, 0, s)),
            pl.BlockSpec((C_out, C_in), lambda n, s: (0, 0)),
            pl.BlockSpec((C_out, 1), lambda n, s: (0, 0)),
        ],
        out_specs=pl.BlockSpec((pl.Squeezed(), C_out, s_tile), lambda n, s: (n, 0, s)),
        compiler_params=pltpu.CompilerParams(
            dimension_semantics=("parallel", "parallel"),
            vmem_limit_bytes=_VMEM_LIMIT),
    )(x.reshape(N, C_in, hw), wp, b2)
    return out.reshape(N, C_out, H, W)


def _fused_resize_conv(x, target_size, weight, bias, compute_dtype, out_dtype):
    """Single-kernel resize+conv using the Kronecker spatial operator.  Returns None
    if the operator / working set does not fit the VMEM budget."""
    N, C_in, H, W = x.shape
    C_t, H_t, W_t = target_size
    s_in, s_out = H * W, H_t * W_t
    c_isz = jnp.dtype(compute_dtype).itemsize
    in_isz = jnp.dtype(x.dtype).itemsize
    out_isz = jnp.dtype(out_dtype).itemsize

    if not _use_kron(s_in, s_out, c_isz):
        return None   # TODO(synk): fused separable-resize+conv kernel for this case

    # conv and bilinear resize commute; pick the order with fewer MXU flops
    flops_cf = 2.0 * C_t * C_in * s_in + 2.0 * C_t * s_in * s_out
    flops_rf = 2.0 * C_in * s_in * s_out + 2.0 * C_t * C_in * s_out
    conv_first = flops_cf <= flops_rf

    tc = _pick_cout_tile(C_t, N, s_in, s_out, out_isz) if conv_first else C_t
    if C_t % tc:
        tc = C_t

    # rough VMEM feasibility: double-buffered blocks + f32 temporaries
    inter = tc * s_in if conv_first else C_in * s_out
    need = (2 * C_in * s_in * in_isz + 2 * s_in * s_out * c_isz
            + 2 * tc * s_out * out_isz + 4 * inter + 4 * tc * s_out
            + 2 * tc * C_in * c_isz + 2 * tc * 4)
    if need > _TILE_BUDGET:
        return None

    kT = _kron_resize_operator_T(H, W, H_t, W_t, compute_dtype)
    wp = weight.astype(compute_dtype)
    b2 = bias.astype(jnp.float32).reshape(C_t, 1)

    out = pl.pallas_call(
        _make_fused_kron_kernel(conv_first, compute_dtype),
        out_shape=jax.ShapeDtypeStruct((N, C_t, s_out), out_dtype),
        grid=(N, C_t // tc),
        in_specs=[
            pl.BlockSpec((pl.Squeezed(), C_in, s_in), lambda n, j: (n, 0, 0)),
            pl.BlockSpec((tc, C_in), lambda n, j: (j, 0)),
            pl.BlockSpec((tc, 1), lambda n, j: (j, 0)),
            pl.BlockSpec((s_in, s_out), lambda n, j: (0, 0)),
        ],
        out_specs=pl.BlockSpec((pl.Squeezed(), tc, s_out), lambda n, j: (n, j, 0)),
        compiler_params=pltpu.CompilerParams(
            dimension_semantics=("parallel", "parallel"),
            vmem_limit_bytes=_VMEM_LIMIT),
    )(x.reshape(N, C_in, s_in), wp, b2, kT)
    return out.reshape(N, C_t, H_t, W_t)


# --------------------------------------------------------------------------
# ResizeNet forward (unify_method='conv')
# --------------------------------------------------------------------------
def resize_net_forward(x, target_size, weight, bias, compute_dtype=jnp.bfloat16):
    """x: (N, C, H, W), target_size: (C_t, H_t, W_t) static tuple,
    weight: (C_t, C), bias: (C_t,)."""
    N, C, H, W = x.shape
    C_t, H_t, W_t = target_size
    out_dtype = x.dtype
    need_resize = (H, W) != (H_t, W_t)
    need_conv = C != C_t

    if need_resize and need_conv:
        fused = _fused_resize_conv(x, target_size, weight, bias, compute_dtype, out_dtype)
        if fused is not None:
            return fused
        # two-kernel chain: pick conv/resize order by flops + intermediate HBM traffic
        c_isz = jnp.dtype(compute_dtype).itemsize
        alpha = _hbm_alpha()
        s_in, s_out = H * W, H_t * W_t
        if _use_kron(s_in, s_out, c_isz):
            r_per_plane = 2.0 * s_in * s_out
        else:   # separable, cheaper of W-first / H-first (matches kernel dispatch)
            r_per_plane = 2.0 * min(H_t * W * (H + W_t), H * W_t * (W + H_t))

        def conv_flops(spatial):
            return 2.0 * N * C * C_t * spatial

        cost_cf = (conv_flops(s_in) + N * C_t * r_per_plane
                   + alpha * 2.0 * c_isz * N * C_t * s_in)
        cost_rf = (N * C * r_per_plane + conv_flops(s_out)
                   + alpha * 2.0 * c_isz * N * C * s_out)
        if cost_cf <= cost_rf:
            y = conv1x1_pallas(x, weight, bias, compute_dtype, out_dtype=compute_dtype)
            return bilinear_resize_pallas(y, H_t, W_t, compute_dtype, out_dtype=out_dtype)
        y = bilinear_resize_pallas(x, H_t, W_t, compute_dtype, out_dtype=compute_dtype)
        return conv1x1_pallas(y, weight, bias, compute_dtype, out_dtype=out_dtype)

    if need_resize:
        return bilinear_resize_pallas(x, H_t, W_t, compute_dtype, out_dtype=out_dtype)
    if need_conv:
        return conv1x1_pallas(x, weight, bias, compute_dtype, out_dtype=out_dtype)
    return x


# --------------------------------------------------------------------------
# pure-jnp reference (matches PyTorch order: resize then conv) for sanity checks
# --------------------------------------------------------------------------
def _ref_forward(x, target_size, weight, bias):
    C_t, H_t, W_t = target_size
    N, C, H, W = x.shape
    x = x.astype(jnp.float32)
    if (H, W) != (H_t, W_t):
        Mh = make_bilinear_matrix(H, H_t)
        Mw = make_bilinear_matrix(W, W_t)
        x = jnp.einsum('oh,nchw,pw->ncop', Mh, x, Mw)
    if C != C_t:
        x = jnp.einsum('oc,nchw->nohw', weight.astype(jnp.float32), x) \
            + bias.astype(jnp.float32)[None, :, None, None]
    return x


def _run_case(key, n, c_in, c_out, h, w, h_t, w_t):
    kx, kw, kb = jax.random.split(key, 3)
    x = jax.random.normal(kx, (n, c_in, h, w), dtype=jnp.float32)
    bound = 1.0 / np.sqrt(c_in)
    weight = jax.random.uniform(kw, (c_out, c_in), jnp.float32, -bound, bound)
    bias = jax.random.uniform(kb, (c_out,), jnp.float32, -bound, bound)
    target_size = (c_out, h_t, w_t)

    y_ref = _ref_forward(x, target_size, weight, bias)

    # tight-tolerance check: f32 compute path
    y32 = jax.block_until_ready(
        resize_net_forward(x, target_size, weight, bias, compute_dtype=jnp.float32))
    assert y32.shape == (n, c_out, h_t, w_t), y32.shape
    np.testing.assert_allclose(np.asarray(y32), np.asarray(y_ref), rtol=1e-4, atol=1e-4)

    # optimized path: bf16 operands, f32 MXU accumulation (relaxed tolerance)
    y = jax.block_until_ready(
        resize_net_forward(x, target_size, weight, bias, compute_dtype=jnp.bfloat16))
    assert y.shape == (n, c_out, h_t, w_t), y.shape
    assert y.dtype == x.dtype
    np.testing.assert_allclose(np.asarray(y), np.asarray(y_ref), rtol=3e-2, atol=3e-2)


if __name__ == "__main__":
    key = jax.random.PRNGKey(0)
    ks = jax.random.split(key, 5)
    # fused kernel (resize applied to the narrower channel side): upsample + expand
    _run_case(ks[0], n=2, c_in=4, c_out=8, h=16, w=16, h_t=32, w_t=32)
    # fused kernel (conv-first at the smaller channel count): downsample + reduce
    _run_case(ks[1], n=2, c_in=8, c_out=4, h=32, w=32, h_t=16, w_t=16)
    # resize only, small plane -> standalone Kronecker resize kernel
    _run_case(ks[2], n=1, c_in=8, c_out=8, h=16, w=16, h_t=32, w_t=32)
    # resize only, larger plane -> separable fallback resize kernel
    _run_case(ks[3], n=1, c_in=8, c_out=8, h=48, w=48, h_t=64, w_t=64)
    # conv only -> tiled 1x1-conv kernel (>=2 parallel grid steps for v7x)
    _run_case(ks[4], n=1, c_in=16, c_out=8, h=16, w=16, h_t=16, w_t=16)
    print("KERNEL_OK")
</pallas_src>

<mosaic_0001>
module attributes {stable_mosaic.version = 11 : i64} {
  func.func @kernel(%arg0: i32, %arg1: i32, %arg2: memref<1x4x256xf32, #tpu.memory_space<vmem>>, %arg3: memref<8x4xf32, #tpu.memory_space<vmem>>, %arg4: memref<8x1xf32, #tpu.memory_space<vmem>>, %arg5: memref<256x1024xf32, #tpu.memory_space<vmem>>, %arg6: memref<1x8x1024xf32, #tpu.memory_space<vmem>>) attributes {dimension_semantics = [#tpu.dimension_semantics<parallel>, #tpu.dimension_semantics<parallel>], iteration_bounds = array<i64: 2, 1>, scalar_prefetch = 0 : i64, scratch_operands = 0 : i64, tpu.core_type = #tpu.core_type<tc>, window_params = [{transform_indices = @transform_0, window_bounds = array<i64: 1, 4, 256>}, {transform_indices = @transform_1, window_bounds = array<i64: 8, 4>}, {transform_indices = @transform_2, window_bounds = array<i64: 8, 1>}, {pipeline_mode = #tpu.pipeline_mode<synchronous>, transform_indices = @transform_3, window_bounds = array<i64: 256, 1024>}, {transform_indices = @transform_4, window_bounds = array<i64: 1, 8, 1024>}]} {
    %c0 = arith.constant 0 : index
    %c0_0 = arith.constant 0 : index
    %c0_1 = arith.constant 0 : index
    %0 = vector.load %arg2[%c0, %c0_0, %c0_1] : memref<1x4x256xf32, #tpu.memory_space<vmem>>, vector<1x4x256xf32>
    %1 = vector.shape_cast %0 : vector<1x4x256xf32> to vector<4x256xf32>
    %c0_2 = arith.constant 0 : index
    %c0_3 = arith.constant 0 : index
    %2 = vector.load %arg3[%c0_2, %c0_3] : memref<8x4xf32, #tpu.memory_space<vmem>>, vector<8x4xf32>
    %c0_4 = arith.constant 0 : index
    %c0_5 = arith.constant 0 : index
    %3 = vector.load %arg5[%c0_4, %c0_5] : memref<256x1024xf32, #tpu.memory_space<vmem>>, vector<256x1024xf32>
    %cst = arith.constant dense<0.000000e+00> : vector<4x1024xf32>
    %4 = tpu.matmul %1, %3, %cst {dimension_numbers = #tpu.dot_dimension_numbers<[1], [0], [0], [1], [0, 0, 1, 1], [], []>} : vector<4x256xf32>, vector<256x1024xf32>, vector<4x1024xf32> -> vector<4x1024xf32>
    %cst_6 = arith.constant dense<0.000000e+00> : vector<8x1024xf32>
    %5 = tpu.matmul %2, %4, %cst_6 {dimension_numbers = #tpu.dot_dimension_numbers<[1], [0], [0], [1], [0, 0, 1, 1], [], []>} : vector<8x4xf32>, vector<4x1024xf32>, vector<8x1024xf32> -> vector<8x1024xf32>
    %c0_7 = arith.constant 0 : index
    %c0_8 = arith.constant 0 : index
    %6 = vector.load %arg4[%c0_7, %c0_8] : memref<8x1xf32, #tpu.memory_space<vmem>>, vector<8x1xf32>
    %7 = vector.broadcast %6 : vector<8x1xf32> to vector<8x1024xf32>
    %8 = arith.addf %5, %7 : vector<8x1024xf32>
    %c0_9 = arith.constant 0 : index
    %c0_10 = arith.constant 0 : index
    %c0_11 = arith.constant 0 : index
    %9 = vector.load %arg6[%c0_9, %c0_10, %c0_11] : memref<1x8x1024xf32, #tpu.memory_space<vmem>>, vector<1x8x1024xf32>
    %10 = vector.shape_cast %9 : vector<1x8x1024xf32> to vector<8x1024xf32>
    %11 = vector.shape_cast %8 : vector<8x1024xf32> to vector<1x8x1024xf32>
    tpu.vector_store %arg6[%c0_9, %c0_10, %c0_11], %11 {strides = array<i32>} : memref<1x8x1024xf32, #tpu.memory_space<vmem>>, vector<1x8x1024xf32>,
    return
  }
  func.func @transform_0(%arg0: i32, %arg1: i32) -> (i32, i32, i32) {
    %c0_i32 = arith.constant 0 : i32
    %c0_i32_0 = arith.constant 0 : i32
    %c0_i32_1 = arith.constant 0 : i32
    return %arg0, %c0_i32, %c0_i32_0 : i32, i32, i32
  }
  func.func @transform_1(%arg0: i32, %arg1: i32) -> (i32, i32) {
    %c0_i32 = arith.constant 0 : i32
    %c0_i32_0 = arith.constant 0 : i32
    return %arg1, %c0_i32 : i32, i32
  }
  func.func @transform_2(%arg0: i32, %arg1: i32) -> (i32, i32) {
    %c0_i32 = arith.constant 0 : i32
    %c0_i32_0 = arith.constant 0 : i32
    return %arg1, %c0_i32 : i32, i32
  }
  func.func @transform_3(%arg0: i32, %arg1: i32) -> (i32, i32) {
    %c0_i32 = arith.constant 0 : i32
    %c0_i32_0 = arith.constant 0 : i32
    %c0_i32_1 = arith.constant 0 : i32
    return %c0_i32, %c0_i32_0 : i32, i32
  }
  func.func @transform_4(%arg0: i32, %arg1: i32) -> (i32, i32, i32) {
    %c0_i32 = arith.constant 0 : i32
    %c0_i32_0 = arith.constant 0 : i32
    return %arg0, %arg1, %c0_i32 : i32, i32, i32
  }
}

</mosaic_0001>

<llo_original>
// kernel: tpu_custom_call.1
$region0: #{tpu_custom_call.1}
  #allocation0 [shape = 'u32[]', space=smem, size = 0x4, offset = 0x4, fixed_abs, tag = 'smem constant byte address 0x4 - core index']
  #allocation1 [shape = 'u32[72,128]{1,0:T(1,128)}', space=vmem, size = 0x9000, scoped, tag = 'internal scratch']
  %s0 = inlined_call_operand.vmem [shape: f32[2,4,256], index: 0, kind: input, shape index: {}]
  %s1 = inlined_call_operand.vmem [shape: f32[8,4], index: 1, kind: input, shape index: {}]
  %s2 = inlined_call_operand.vmem [shape: f32[8,1], index: 2, kind: input, shape index: {}]
  %s3 = inlined_call_operand.hbm [shape: f32[256,1024], index: 3, kind: input, shape index: {}]
  %s4 = inlined_call_operand.hbm [shape: f32[2,8,1024], index: 4, kind: output, shape index: {}]
  %s5 = sld [smem:[#allocation0]]
  $region53: #{tpu_custom_call.1} parent=0
    _
  %s7 = ssub.s32 1, %s5
  %s8 = scalar_select 0, %s7, %s5
  $region1: #{tpu_custom_call.1} parent=0
    #allocation2 [shape = 'u8[1048576]{0}', space=vmem, size = 0x100000, scoped, tag = 'input window, operand 3, single buffered']
    #allocation3 [shape = 's32[2]{0}', space=sflag, size = 0x8, scoped, tag = 'scoped memory for tpu_custom_call.1']
    #allocation4 [shape = 's32[2]{0}', space=sflag, size = 0x8, scoped, tag = 'scoped memory for tpu_custom_call.1']
    #allocation5 [shape = 'u8[65536]{0}', space=vmem, size = 0x10000, scoped, tag = 'output window, operand 0']
    %9 = vsyncpa [#allocation3], 0
    %10 = vsyncpa [#allocation4], 0
    %s11 = scalar_lea.sflag [#allocation4], 1
    %12 = vsyncpa %s11, 0
    loop: start=0, step=1, limit=4
    $region2: #{tpu_custom_call.1} parent=1 // loop_pre_header
      _
    $region3: #{tpu_custom_call.1} parent=1 // loop_header
      %s14 = sphi 0, %s18
      %p15 = scmp.ge.s32.totalorder %s14, 4
      %s21 = sphi 0, %s33
      %s22 = sphi 0, %s29
      %s23 = sphi 0, %s21
      %s24 = sphi 0, %s22
      %s25 = sphi 0, %s23
      %s26 = sphi 0, %s24
      %s36 = sphi 0, %s38
      %s39 = sphi 0, %s36
      %s40 = sphi 0, %s39
      %s56 = sphi 0, %s40
      %s62 = sphi 0, %s64
      %s65 = sphi 0, %s62
      %s66 = sphi 0, %s65
      %s82 = sphi 0, %s66
      %s88 = sphi 0, %s90
      %s91 = sphi 0, %s88
      %s92 = sphi 0, %s91
      %s108 = sphi 0, %s92
      %s112 = sphi 0, %s112
      %s114 = sphi 0, %s112
      %s115 = sphi 0, %s114
      %s129 = sphi 0, %s115
      %s137 = sphi 0, %s139
      %s140 = sphi 0, %s137
      %s141 = sphi 0, %s140
      %s157 = sphi 0, %s141
    $region4: #{tpu_custom_call.1} parent=1 // loop_header_branch
      %17 = sbr.rel (%p15) target = $region8
    $region5: #{tpu_custom_call.1} parent=1 // loop_body
      %s19 = ssub.s32 %s14, 1
      %s20 = ssub.s32 %s14, 2
      %s27 = sadd.s32 1, %s22
      %p28 = scmp.ge.s32.totalorder %s27, 1
      %s29 = scalar_select %p28, 0, %s27
      %s30 = sadd.s32 1, %s21
      %s31 = scalar_select %p28, %s30, %s21
      %p32 = scmp.ge.s32.totalorder %s31, 2
      %s33 = scalar_select %p32, 0, %s31
      %s34 = ssub.s32 %s21, %s33
      %p35 = scmp.eq.s32.totalorder %s34, 0
      %s37 = sadd.s32 %s36, 1
      %s38 = scalar_select %p35, %s36, %s37
      %p41 = pneg %p35
      %p42 = scmp.eq.s32.totalorder %s14, 1
      %p43 = por %p41, %p42
      %p44 = scmp.ne.s32.totalorder %s36, %s39
      %p45 = scmp.eq.s32.totalorder %s14, 0
      %p46 = por %p44, %p45
      %p47 = scmp.ne.s32.totalorder %s36, %s39
      %p48 = scmp.eq.s32.totalorder %s19, 1
      %p49 = por %p47, %p48
      %p50 = scmp.ne.s32.totalorder %s39, %s40
      %p51 = scmp.eq.s32.totalorder %s19, 0
      %p52 = por %p50, %p51
      %p53 = scmp.ne.s32.totalorder %s39, %s40
      %p54 = scmp.eq.s32.totalorder %s20, 1
      %p55 = por %p53, %p54
      %p57 = scmp.ne.s32.totalorder %s40, %s56
      %p58 = scmp.eq.s32.totalorder %s20, 0
      %p59 = por %p57, %p58
      %s60 = ssub.s32 %s22, %s29
      %p61 = scmp.eq.s32.totalorder %s60, 0
      %s63 = sadd.s32 %s62, 1
      %s64 = scalar_select %p61, %s62, %s63
      %p67 = pneg %p61
      %p68 = scmp.eq.s32.totalorder %s14, 1
      %p69 = por %p67, %p68
      %p70 = scmp.ne.s32.totalorder %s62, %s65
      %p71 = scmp.eq.s32.totalorder %s14, 0
      %p72 = por %p70, %p71
      %p73 = scmp.ne.s32.totalorder %s62, %s65
      %p74 = scmp.eq.s32.totalorder %s19, 1
      %p75 = por %p73, %p74
      %p76 = scmp.ne.s32.totalorder %s65, %s66
      %p77 = scmp.eq.s32.totalorder %s19, 0
      %p78 = por %p76, %p77
      %p79 = scmp.ne.s32.totalorder %s65, %s66
      %p80 = scmp.eq.s32.totalorder %s20, 1
      %p81 = por %p79, %p80
      %p83 = scmp.ne.s32.totalorder %s66, %s82
      %p84 = scmp.eq.s32.totalorder %s20, 0
      %p85 = por %p83, %p84
      %s86 = ssub.s32 %s22, %s29
      %p87 = scmp.eq.s32.totalorder %s86, 0
      %s89 = sadd.s32 %s88, 1
      %s90 = scalar_select %p87, %s88, %s89
      %p93 = pneg %p87
      %p94 = scmp.eq.s32.totalorder %s14, 1
      %p95 = por %p93, %p94
      %p96 = scmp.ne.s32.totalorder %s88, %s91
      %p97 = scmp.eq.s32.totalorder %s14, 0
      %p98 = por %p96, %p97
      %p99 = scmp.ne.s32.totalorder %s88, %s91
      %p100 = scmp.eq.s32.totalorder %s19, 1
      %p101 = por %p99, %p100
      %p102 = scmp.ne.s32.totalorder %s91, %s92
      %p103 = scmp.eq.s32.totalorder %s19, 0
      %p104 = por %p102, %p103
      %p105 = scmp.ne.s32.totalorder %s91, %s92
      %p106 = scmp.eq.s32.totalorder %s20, 1
      %p107 = por %p105, %p106
      %p109 = scmp.ne.s32.totalorder %s92, %s108
      %p110 = scmp.eq.s32.totalorder %s20, 0
      %p111 = por %p109, %p110
      %s113 = sadd.s32 %s112, 1
      %p116 = scmp.eq.s32.totalorder %s14, 1
      %p117 = scmp.ne.s32.totalorder %s112, %s114
      %p118 = scmp.eq.s32.totalorder %s14, 0
      %p119 = por %p117, %p118
      %p120 = scmp.ne.s32.totalorder %s112, %s114
      %p121 = scmp.eq.s32.totalorder %s19, 1
      %p122 = por %p120, %p121
      %p123 = scmp.ne.s32.totalorder %s114, %s115
      %p124 = scmp.eq.s32.totalorder %s19, 0
      %p125 = por %p123, %p124
      %p126 = scmp.ne.s32.totalorder %s114, %s115
      %p127 = scmp.eq.s32.totalorder %s20, 1
      %p128 = por %p126, %p127
      %p130 = scmp.ne.s32.totalorder %s115, %s129
      %p131 = scmp.eq.s32.totalorder %s20, 0
      %p132 = por %p130, %p131
      %s133 = ssub.s32 %s21, %s33
      %s134 = ssub.s32 %s22, %s29
      %s135 = sor.u32 %s133, %s134
      %p136 = scmp.eq.s32.totalorder %s135, 0
      %s138 = sadd.s32 %s137, 1
      %s139 = scalar_select %p136, %s137, %s138
      %p142 = pneg %p136
      %p143 = scmp.eq.s32.totalorder %s14, 1
      %p144 = por %p142, %p143
      %p145 = scmp.ne.s32.totalorder %s137, %s140
      %p146 = scmp.eq.s32.totalorder %s14, 0
      %p147 = por %p145, %p146
      %p148 = scmp.ne.s32.totalorder %s137, %s140
      %p149 = scmp.eq.s32.totalorder %s19, 1
      %p150 = por %p148, %p149
      %p151 = scmp.ne.s32.totalorder %s140, %s141
      %p152 = scmp.eq.s32.totalorder %s19, 0
      %p153 = por %p151, %p152
      %p154 = scmp.ne.s32.totalorder %s140, %s141
      %p155 = scmp.eq.s32.totalorder %s20, 1
      %p156 = por %p154, %p155
      %p158 = scmp.ne.s32.totalorder %s141, %s157
      %p159 = scmp.eq.s32.totalorder %s20, 0
      %p160 = por %p158, %p159
      %p161 = scmp.le.s32.totalorder 1, %s14
      %p162 = scmp.lt.s32.totalorder %s14, 3
      %p163 = pnand %p161, %p162
      %p164 = pneg %p163
      // Predicated region
      $region9: #{tpu_custom_call.1} parent=5 // pred_check
        _
      $region10: #{tpu_custom_call.1} parent=5 // pred_check_branch
        %166 = sbr.rel (%p163) target = $region12
      $region11: #{tpu_custom_call.1} parent=5 // pred_region
        %s167 = ssub.s32 %s14, 1
        // Predicated region
        $region13: #{tpu_custom_call.1} parent=11 // pred_check
          %p168 = pneg %p78
        $region14: #{tpu_custom_call.1} parent=11 // pred_check_branch
          %170 = sbr.rel (%p168) target = $region16
        $region15: #{tpu_custom_call.1} parent=11 // pred_region
          %p171 = scmp.lt.s32.totalorder %s24, 0
          %s172 = scalar_select %p171, %s24, 0
          %s173 = smul.addr %s172, 8
          %s174 = scalar_lea.vmem %s1, %s173
        $region16: #{tpu_custom_call.1} parent=11 // pred_fallthru
          _
        // Predicated region
        $region17: #{tpu_custom_call.1} parent=11 // pred_check
          %p175 = pneg %p104
        $region18: #{tpu_custom_call.1} parent=11 // pred_check_branch
          %177 = sbr.rel (%p175) target = $region20
        $region19: #{tpu_custom_call.1} parent=11 // pred_region
          %p178 = scmp.lt.s32.totalorder %s24, 0
          %s179 = scalar_select %p178, %s24, 0
          %s180 = smul.addr %s179, 8
          %s181 = scalar_lea.vmem %s2, %s180
        $region20: #{tpu_custom_call.1} parent=11 // pred_fallthru
          _
        // Predicated region
        $region21: #{tpu_custom_call.1} parent=11 // pred_check
          %p182 = pneg %p125
        $region22: #{tpu_custom_call.1} parent=11 // pred_check_branch
          %184 = sbr.rel (%p182) target = $region24
        $region23: #{tpu_custom_call.1} parent=11 // pred_region
          %186 = vsyncadd [#allocation3], 0
          %s187 = sshll.u32 %s3, 4
          %s188 = int_to_ptr.hbm [resolvable:$true] %s187
          %s189 = sshll.u32 [#allocation2], 4
          %s190 = int_to_ptr.vmem [resolvable:$true] %s189
          %195 = dma.hbm_to_vmem [thread:$0]  %s188, 32768, %s190, [#allocation3], 1024, 1024, 64
        $region24: #{tpu_custom_call.1} parent=11 // pred_fallthru
          _
      $region12: #{tpu_custom_call.1} parent=5 // pred_fallthru
        _
      %p196 = scmp.lt.s32.totalorder %s14, 2
      // Predicated region
      $region25: #{tpu_custom_call.1} parent=5 // pred_check
        %p197 = pneg %p196
      $region26: #{tpu_custom_call.1} parent=5 // pred_check_branch
        %199 = sbr.rel (%p197) target = $region28
      $region27: #{tpu_custom_call.1} parent=5 // pred_region
        // Predicated region
        $region29: #{tpu_custom_call.1} parent=27 // pred_check
          %p200 = pneg %p46
        $region30: #{tpu_custom_call.1} parent=27 // pred_check_branch
          %202 = sbr.rel (%p200) target = $region32
        $region31: #{tpu_custom_call.1} parent=27 // pred_region
          %p203 = scmp.lt.s32.totalorder %s21, 1
          %s204 = scalar_select %p203, %s21, 1
          %s205 = smul.addr %s204, 2
          %s206 = smul.addr %s205, 4
          %s207 = scalar_lea.vmem %s0, %s206
        $region32: #{tpu_custom_call.1} parent=27 // pred_fallthru
          _
      $region28: #{tpu_custom_call.1} parent=5 // pred_fallthru
        _
      %p208 = scmp.le.s32.totalorder 1, %s14
      %p209 = scmp.lt.s32.totalorder %s14, 3
      %p210 = pnand %p208, %p209
      %p211 = pneg %p210
      // Predicated region
      $region33: #{tpu_custom_call.1} parent=5 // pred_check
        _
      $region34: #{tpu_custom_call.1} parent=5 // pred_check_branch
        %213 = sbr.rel (%p210) target = $region36
      $region35: #{tpu_custom_call.1} parent=5 // pred_region
        %s214 = ssub.s32 %s14, 1
        // Predicated region
        $region37: #{tpu_custom_call.1} parent=35 // pred_check
          %p215 = pneg %p125
        $region38: #{tpu_custom_call.1} parent=35 // pred_check_branch
          %217 = sbr.rel (%p215) target = $region40
        $region39: #{tpu_custom_call.1} parent=35 // pred_region
          %219 = dma.done [#allocation3], 32768
        $region40: #{tpu_custom_call.1} parent=35 // pred_fallthru
          _
        %p220 = scmp.lt.s32.totalorder %s23, 1
        %s221 = scalar_select %p220, %s23, 1
        %s222 = smul.addr %s221, 2
        %s223 = smul.addr %s222, 4
        %s224 = scalar_lea.vmem %s0, %s223
        %p225 = pneg %p52
        %p226 = pneg %p49
        %p227 = scmp.lt.s32.totalorder %s24, 0
        %s228 = scalar_select %p227, %s24, 0
        %s229 = smul.addr %s228, 8
        %s230 = scalar_lea.vmem %s1, %s229
        %p231 = pneg %p78
        %p232 = pneg %p75
        %p233 = scmp.lt.s32.totalorder %s24, 0
        %s234 = scalar_select %p233, %s24, 0
        %s235 = smul.addr %s234, 8
        %s236 = scalar_lea.vmem %s2, %s235
        %p237 = pneg %p104
        %p238 = pneg %p101
        %p239 = pneg %p125
        %p240 = pneg %p122
        %p241 = pneg %p153
        %p242 = pneg %p150
        %s243 = sand.u32 %s140, 1
        %s244 = scalar_lea.sflag [#allocation4], %s243
        %s245 = sand.u32 %s140, 1
        %s246 = smul.addr %s245, 64
        %s247 = scalar_lea.vmem [#allocation5], %s246
        %p248 = scmp.lt.s32.totalorder %s23, 1
        %s249 = scalar_select %p248, %s23, 1
        %s250 = smul.addr %s249, 2
        %s251 = smul.addr %s250, 4
        %s252 = scalar_lea.vmem %s0, %s251
        %p253 = scmp.lt.s32.totalorder %s24, 0
        %s254 = scalar_select %p253, %s24, 0
        %s255 = smul.addr %s254, 8
        %s256 = scalar_lea.vmem %s1, %s255
        %p257 = scmp.lt.s32.totalorder %s24, 0
        %s258 = scalar_select %p257, %s24, 0
        %s259 = smul.addr %s258, 8
        %s260 = scalar_lea.vmem %s2, %s259
        %v261 = vld [vmem:[%s252] sm:$0xff]
        %v262 = vld [vmem:[%s256] sm:$0xff]
        %v263 = vld [vmem:[#allocation2] sm:$0xff]
        %v264 = vld [vmem:[#allocation2 + $0x8] sm:$0xff]
        %v265 = vld [vmem:[#allocation2 + $0x10] sm:$0xff]
        %v266 = vld [vmem:[#allocation2 + $0x18] sm:$0xff]
        %v267 = vld [vmem:[#allocation2 + $0x20] sm:$0xff]
        %v268 = vld [vmem:[#allocation2 + $0x28] sm:$0xff]
        %v269 = vld [vmem:[#allocation2 + $0x30] sm:$0xff]
        %v270 = vld [vmem:[#allocation2 + $0x38] sm:$0xff]
        %v271 = vld [vmem:[#allocation2 + $0x40] sm:$0xff]
        %v272 = vld [vmem:[#allocation2 + $0x48] sm:$0xff]
        %v273 = vld [vmem:[#allocation2 + $0x50] sm:$0xff]
        %v274 = vld [vmem:[#allocation2 + $0x58] sm:$0xff]
        %v275 = vld [vmem:[#allocation2 + $0x60] sm:$0xff]
        %v276 = vld [vmem:[#allocation2 + $0x68] sm:$0xff]
        %v277 = vld [vmem:[#allocation2 + $0x70] sm:$0xff]
        %v278 = vld [vmem:[#allocation2 + $0x78] sm:$0xff]
        %v279 = vld [vmem:[#allocation2 + $0x80] sm:$0xff]
        %v280 = vld [vmem:[#allocation2 + $0x88] sm:$0xff]
        %v281 = vld [vmem:[#allocation2 + $0x90] sm:$0xff]
        %v282 = vld [vmem:[#allocation2 + $0x98] sm:$0xff]
        %v283 = vld [vmem:[#allocation2 + $0xa0] sm:$0xff]
        %v284 = vld [vmem:[#allocation2 + $0xa8] sm:$0xff]
        %v285 = vld [vmem:[#allocation2 + $0xb0] sm:$0xff]
        %v286 = vld [vmem:[#allocation2 + $0xb8] sm:$0xff]
        %v287 = vld [vmem:[#allocation2 + $0xc0] sm:$0xff]
        %v288 = vld [vmem:[#allocation2 + $0xc8] sm:$0xff]
        %v289 = vld [vmem:[#allocation2 + $0xd0] sm:$0xff]
        %v290 = vld [vmem:[#allocation2 + $0xd8] sm:$0xff]
        %v291 = vld [vmem:[#allocation2 + $0xe0] sm:$0xff]
        %v292 = vld [vmem:[#allocation2 + $0xe8] sm:$0xff]
        %v293 = vld [vmem:[#allocation2 + $0xf0] sm:$0xff]
        %v294 = vld [vmem:[#allocation2 + $0xf8] sm:$0xff]
        %v295 = vld [vmem:[#allocation2 + $0x100] sm:$0xff]
        %v296 = vld [vmem:[#allocation2 + $0x108] sm:$0xff]
        %v297 = vld [vmem:[#allocation2 + $0x110] sm:$0xff]
        %v298 = vld [vmem:[#allocation2 + $0x118] sm:$0xff]
        %v299 = vld [vmem:[#allocation2 + $0x120] sm:$0xff]
        %v300 = vld [vmem:[#allocation2 + $0x128] sm:$0xff]
        %v301 = vld [vmem:[#allocation2 + $0x130] sm:$0xff]
        %v302 = vld [vmem:[#allocation2 + $0x138] sm:$0xff]
        %v303 = vld [vmem:[#allocation2 + $0x140] sm:$0xff]
        %v304 = vld [vmem:[#allocation2 + $0x148] sm:$0xff]
        %v305 = vld [vmem:[#allocation2 + $0x150] sm:$0xff]
        %v306 = vld [vmem:[#allocation2 + $0x158] sm:$0xff]
        %v307 = vld [vmem:[#allocation2 + $0x160] sm:$0xff]
        %v308 = vld [vmem:[#allocation2 + $0x168] sm:$0xff]
        %v309 = vld [vmem:[#allocation2 + $0x170] sm:$0xff]
        %v310 = vld [vmem:[#allocation2 + $0x178] sm:$0xff]
        %v311 = vld [vmem:[#allocation2 + $0x180] sm:$0xff]
        %v312 = vld [vmem:[#allocation2 + $0x188] sm:$0xff]
        %v313 = vld [vmem:[#allocation2 + $0x190] sm:$0xff]
        %v314 = vld [vmem:[#allocation2 + $0x198] sm:$0xff]
        %v315 = vld [vmem:[#allocation2 + $0x1a0] sm:$0xff]
        %v316 = vld [vmem:[#allocation2 + $0x1a8] sm:$0xff]
        %v317 = vld [vmem:[#allocation2 + $0x1b0] sm:$0xff]
        %v318 = vld [vmem:[#allocation2 + $0x1b8] sm:$0xff]
        %v319 = vld [vmem:[#allocation2 + $0x1c0] sm:$0xff]
        %v320 = vld [vmem:[#allocation2 + $0x1c8] sm:$0xff]
        %v321 = vld [vmem:[#allocation2 + $0x1d0] sm:$0xff]
        %v322 = vld [vmem:[#allocation2 + $0x1d8] sm:$0xff]
        %v323 = vld [vmem:[#allocation2 + $0x1e0] sm:$0xff]
        %v324 = vld [vmem:[#allocation2 + $0x1e8] sm:$0xff]
        %v325 = vld [vmem:[#allocation2 + $0x1f0] sm:$0xff]
        %v326 = vld [vmem:[#allocation2 + $0x1f8] sm:$0xff]
        %v327 = vld [vmem:[#allocation2 + $0x200] sm:$0xff]
        %v328 = vld [vmem:[#allocation2 + $0x208] sm:$0xff]
        %v329 = vld [vmem:[#allocation2 + $0x210] sm:$0xff]
        %v330 = vld [vmem:[#allocation2 + $0x218] sm:$0xff]
        %v331 = vld [vmem:[#allocation2 + $0x220] sm:$0xff]
        %v332 = vld [vmem:[#allocation2 + $0x228] sm:$0xff]
        %v333 = vld [vmem:[#allocation2 + $0x230] sm:$0xff]
        %v334 = vld [vmem:[#allocation2 + $0x238] sm:$0xff]
        %v335 = vld [vmem:[#allocation2 + $0x240] sm:$0xff]
        %v336 = vld [vmem:[#allocation2 + $0x248] sm:$0xff]
        %v337 = vld [vmem:[#allocation2 + $0x250] sm:$0xff]
        %v338 = vld [vmem:[#allocation2 + $0x258] sm:$0xff]
        %v339 = vld [vmem:[#allocation2 + $0x260] sm:$0xff]
        %v340 = vld [vmem:[#allocation2 + $0x268] sm:$0xff]
        %v341 = vld [vmem:[#allocation2 + $0x270] sm:$0xff]
        %v342 = vld [vmem:[#allocation2 + $0x278] sm:$0xff]
        %v343 = vld [vmem:[#allocation2 + $0x280] sm:$0xff]
        %v344 = vld [vmem:[#allocation2 + $0x288] sm:$0xff]
        %v345 = vld [vmem:[#allocation2 + $0x290] sm:$0xff]
        %v346 = vld [vmem:[#allocation2 + $0x298] sm:$0xff]
        %v347 = vld [vmem:[#allocation2 + $0x2a0] sm:$0xff]
        %v348 = vld [vmem:[#allocation2 + $0x2a8] sm:$0xff]
        %v349 = vld [vmem:[#allocation2 + $0x2b0] sm:$0xff]
        %v350 = vld [vmem:[#allocation2 + $0x2b8] sm:$0xff]
        %v351 = vld [vmem:[#allocation2 + $0x2c0] sm:$0xff]
        %v352 = vld [vmem:[#allocation2 + $0x2c8] sm:$0xff]
        %v353 = vld [vmem:[#allocation2 + $0x2d0] sm:$0xff]
        %v354 = vld [vmem:[#allocation2 + $0x2d8] sm:$0xff]
        %v355 = vld [vmem:[#allocation2 + $0x2e0] sm:$0xff]
        %v356 = vld [vmem:[#allocation2 + $0x2e8] sm:$0xff]
        %v357 = vld [vmem:[#allocation2 + $0x2f0] sm:$0xff]
        %v358 = vld [vmem:[#allocation2 + $0x2f8] sm:$0xff]
        %v359 = vld [vmem:[#allocation2 + $0x300] sm:$0xff]
        %v360 = vld [vmem:[#allocation2 + $0x308] sm:$0xff]
        %v361 = vld [vmem:[#allocation2 + $0x310] sm:$0xff]
        %v362 = vld [vmem:[#allocation2 + $0x318] sm:$0xff]
        %v363 = vld [vmem:[#allocation2 + $0x320] sm:$0xff]
        %v364 = vld [vmem:[#allocation2 + $0x328] sm:$0xff]
        %v365 = vld [vmem:[#allocation2 + $0x330] sm:$0xff]
        %v366 = vld [vmem:[#allocation2 + $0x338] sm:$0xff]
        %v367 = vld [vmem:[#allocation2 + $0x340] sm:$0xff]
        %v368 = vld [vmem:[#allocation2 + $0x348] sm:$0xff]
        %v369 = vld [vmem:[#allocation2 + $0x350] sm:$0xff]
        %v370 = vld [vmem:[#allocation2 + $0x358] sm:$0xff]
        %v371 = vld [vmem:[#allocation2 + $0x360] sm:$0xff]
        %v372 = vld [vmem:[#allocation2 + $0x368] sm:$0xff]
        %v373 = vld [vmem:[#allocation2 + $0x370] sm:$0xff]
        %v374 = vld [vmem:[#allocation2 + $0x378] sm:$0xff]
        %v375 = vld [vmem:[#allocation2 + $0x380] sm:$0xff]
        %v376 = vld [vmem:[#allocation2 + $0x388] sm:$0xff]
        %v377 = vld [vmem:[#allocation2 + $0x390] sm:$0xff]
        %v378 = vld [vmem:[#allocation2 + $0x398] sm:$0xff]
        %v379 = vld [vmem:[#allocation2 + $0x3a0] sm:$0xff]
        %v380 = vld [vmem:[#allocation2 + $0x3a8] sm:$0xff]
        %v381 = vld [vmem:[#allocation2 + $0x3b0] sm:$0xff]
        %v382 = vld [vmem:[#allocation2 + $0x3b8] sm:$0xff]
        %v383 = vld [vmem:[#allocation2 + $0x3c0] sm:$0xff]
        %v384 = vld [vmem:[#allocation2 + $0x3c8] sm:$0xff]
        %v385 = vld [vmem:[#allocation2 + $0x3d0] sm:$0xff]
        %v386 = vld [vmem:[#allocation2 + $0x3d8] sm:$0xff]
        %v387 = vld [vmem:[#allocation2 + $0x3e0] sm:$0xff]
        %v388 = vld [vmem:[#allocation2 + $0x3e8] sm:$0xff]
        %v389 = vld [vmem:[#allocation2 + $0x3f0] sm:$0xff]
        %v390 = vld [vmem:[#allocation2 + $0x3f8] sm:$0xff]
        %v391 = vld [vmem:[#allocation2 + $0x400] sm:$0xff]
        %v392 = vld [vmem:[#allocation2 + $0x408] sm:$0xff]
        %v393 = vld [vmem:[#allocation2 + $0x410] sm:$0xff]
        %v394 = vld [vmem:[#allocation2 + $0x418] sm:$0xff]
        %v395 = vld [vmem:[#allocation2 + $0x420] sm:$0xff]
        %v396 = vld [vmem:[#allocation2 + $0x428] sm:$0xff]
        %v397 = vld [vmem:[#allocation2 + $0x430] sm:$0xff]
        %v398 = vld [vmem:[#allocation2 + $0x438] sm:$0xff]
        %v399 = vld [vmem:[#allocation2 + $0x440] sm:$0xff]
        %v400 = vld [vmem:[#allocation2 + $0x448] sm:$0xff]
        %v401 = vld [vmem:[#allocation2 + $0x450] sm:$0xff]
        %v402 = vld [vmem:[#allocation2 + $0x458] sm:$0xff]
        %v403 = vld [vmem:[#allocation2 + $0x460] sm:$0xff]
        %v404 = vld [vmem:[#allocation2 + $0x468] sm:$0xff]
        %v405 = vld [vmem:[#allocation2 + $0x470] sm:$0xff]
        %v406 = vld [vmem:[#allocation2 + $0x478] sm:$0xff]
        %v407 = vld [vmem:[#allocation2 + $0x480] sm:$0xff]
        %v408 = vld [vmem:[#allocation2 + $0x488] sm:$0xff]
        %v409 = vld [vmem:[#allocation2 + $0x490] sm:$0xff]
        %v410 = vld [vmem:[#allocation2 + $0x498] sm:$0xff]
        %v411 = vld [vmem:[#allocation2 + $0x4a0] sm:$0xff]
        %v412 = vld [vmem:[#allocation2 + $0x4a8] sm:$0xff]
        %v413 = vld [vmem:[#allocation2 + $0x4b0] sm:$0xff]
        %v414 = vld [vmem:[#allocation2 + $0x4b8] sm:$0xff]
        %v415 = vld [vmem:[#allocation2 + $0x4c0] sm:$0xff]
        %v416 = vld [vmem:[#allocation2 + $0x4c8] sm:$0xff]
        %v417 = vld [vmem:[#allocation2 + $0x4d0] sm:$0xff]
        %v418 = vld [vmem:[#allocation2 + $0x4d8] sm:$0xff]
        %v419 = vld [vmem:[#allocation2 + $0x4e0] sm:$0xff]
        %v420 = vld [vmem:[#allocation2 + $0x4e8] sm:$0xff]
        %v421 = vld [vmem:[#allocation2 + $0x4f0] sm:$0xff]
        %v422 = vld [vmem:[#allocation2 + $0x4f8] sm:$0xff]
        %v423 = vld [vmem:[#allocation2 + $0x500] sm:$0xff]
        %v424 = vld [vmem:[#allocation2 + $0x508] sm:$0xff]
        %v425 = vld [vmem:[#allocation2 + $0x510] sm:$0xff]
        %v426 = vld [vmem:[#allocation2 + $0x518] sm:$0xff]
        %v427 = vld [vmem:[#allocation2 + $0x520] sm:$0xff]
        %v428 = vld [vmem:[#allocation2 + $0x528] sm:$0xff]
        %v429 = vld [vmem:[#allocation2 + $0x530] sm:$0xff]
        %v430 = vld [vmem:[#allocation2 + $0x538] sm:$0xff]
        %v431 = vld [vmem:[#allocation2 + $0x540] sm:$0xff]
        %v432 = vld [vmem:[#allocation2 + $0x548] sm:$0xff]
        %v433 = vld [vmem:[#allocation2 + $0x550] sm:$0xff]
        %v434 = vld [vmem:[#allocation2 + $0x558] sm:$0xff]
        %v435 = vld [vmem:[#allocation2 + $0x560] sm:$0xff]
        %v436 = vld [vmem:[#allocation2 + $0x568] sm:$0xff]
        %v437 = vld [vmem:[#allocation2 + $0x570] sm:$0xff]
        %v438 = vld [vmem:[#allocation2 + $0x578] sm:$0xff]
        %v439 = vld [vmem:[#allocation2 + $0x580] sm:$0xff]
        %v440 = vld [vmem:[#allocation2 + $0x588] sm:$0xff]
        %v441 = vld [vmem:[#allocation2 + $0x590] sm:$0xff]
        %v442 = vld [vmem:[#allocation2 + $0x598] sm:$0xff]
        %v443 = vld [vmem:[#allocation2 + $0x5a0] sm:$0xff]
        %v444 = vld [vmem:[#allocation2 + $0x5a8] sm:$0xff]
        %v445 = vld [vmem:[#allocation2 + $0x5b0] sm:$0xff]
        %v446 = vld [vmem:[#allocation2 + $0x5b8] sm:$0xff]
        %v447 = vld [vmem:[#allocation2 + $0x5c0] sm:$0xff]
        %v448 = vld [vmem:[#allocation2 + $0x5c8] sm:$0xff]
        %v449 = vld [vmem:[#allocation2 + $0x5d0] sm:$0xff]
        %v450 = vld [vmem:[#allocation2 + $0x5d8] sm:$0xff]
        %v451 = vld [vmem:[#allocation2 + $0x5e0] sm:$0xff]
        %v452 = vld [vmem:[#allocation2 + $0x5e8] sm:$0xff]
        %v453 = vld [vmem:[#allocation2 + $0x5f0] sm:$0xff]
        %v454 = vld [vmem:[#allocation2 + $0x5f8] sm:$0xff]
        %v455 = vld [vmem:[#allocation2 + $0x600] sm:$0xff]
        %v456 = vld [vmem:[#allocation2 + $0x608] sm:$0xff]
        %v457 = vld [vmem:[#allocation2 + $0x610] sm:$0xff]
        %v458 = vld [vmem:[#allocation2 + $0x618] sm:$0xff]
        %v459 = vld [vmem:[#allocation2 + $0x620] sm:$0xff]
        %v460 = vld [vmem:[#allocation2 + $0x628] sm:$0xff]
        %v461 = vld [vmem:[#allocation2 + $0x630] sm:$0xff]
        %v462 = vld [vmem:[#allocation2 + $0x638] sm:$0xff]
        %v463 = vld [vmem:[#allocation2 + $0x640] sm:$0xff]
        %v464 = vld [vmem:[#allocation2 + $0x648] sm:$0xff]
        %v465 = vld [vmem:[#allocation2 + $0x650] sm:$0xff]
        %v466 = vld [vmem:[#allocation2 + $0x658] sm:$0xff]
        %v467 = vld [vmem:[#allocation2 + $0x660] sm:$0xff]
        %v468 = vld [vmem:[#allocation2 + $0x668] sm:$0xff]
        %v469 = vld [vmem:[#allocation2 + $0x670] sm:$0xff]
        %v470 = vld [vmem:[#allocation2 + $0x678] sm:$0xff]
        %v471 = vld [vmem:[#allocation2 + $0x680] sm:$0xff]
        %v472 = vld [vmem:[#allocation2 + $0x688] sm:$0xff]
        %v473 = vld [vmem:[#allocation2 + $0x690] sm:$0xff]
        %v474 = vld [vmem:[#allocation2 + $0x698] sm:$0xff]
        %v475 = vld [vmem:[#allocation2 + $0x6a0] sm:$0xff]
        %v476 = vld [vmem:[#allocation2 + $0x6a8] sm:$0xff]
        %v477 = vld [vmem:[#allocation2 + $0x6b0] sm:$0xff]
        %v478 = vld [vmem:[#allocation2 + $0x6b8] sm:$0xff]
        %v479 = vld [vmem:[#allocation2 + $0x6c0] sm:$0xff]
        %v480 = vld [vmem:[#allocation2 + $0x6c8] sm:$0xff]
        %v481 = vld [vmem:[#allocation2 + $0x6d0] sm:$0xff]
        %v482 = vld [vmem:[#allocation2 + $0x6d8] sm:$0xff]
        %v483 = vld [vmem:[#allocation2 + $0x6e0] sm:$0xff]
        %v484 = vld [vmem:[#allocation2 + $0x6e8] sm:$0xff]
        %v485 = vld [vmem:[#allocation2 + $0x6f0] sm:$0xff]
        %v486 = vld [vmem:[#allocation2 + $0x6f8] sm:$0xff]
        %v487 = vld [vmem:[#allocation2 + $0x700] sm:$0xff]
        %v488 = vld [vmem:[#allocation2 + $0x708] sm:$0xff]
        %v489 = vld [vmem:[#allocation2 + $0x710] sm:$0xff]
        %v490 = vld [vmem:[#allocation2 + $0x718] sm:$0xff]
        %v491 = vld [vmem:[#allocation2 + $0x720] sm:$0xff]
        %v492 = vld [vmem:[#allocation2 + $0x728] sm:$0xff]
        %v493 = vld [vmem:[#allocation2 + $0x730] sm:$0xff]
        %v494 = vld [vmem:[#allocation2 + $0x738] sm:$0xff]
        %v495 = vld [vmem:[#allocation2 + $0x740] sm:$0xff]
        %v496 = vld [vmem:[#allocation2 + $0x748] sm:$0xff]
        %v497 = vld [vmem:[#allocation2 + $0x750] sm:$0xff]
        %v498 = vld [vmem:[#allocation2 + $0x758] sm:$0xff]
        %v499 = vld [vmem:[#allocation2 + $0x760] sm:$0xff]
        %v500 = vld [vmem:[#allocation2 + $0x768] sm:$0xff]
        %v501 = vld [vmem:[#allocation2 + $0x770] sm:$0xff]
        %v502 = vld [vmem:[#allocation2 + $0x778] sm:$0xff]
        %v503 = vld [vmem:[#allocation2 + $0x780] sm:$0xff]
        %v504 = vld [vmem:[#allocation2 + $0x788] sm:$0xff]
        %v505 = vld [vmem:[#allocation2 + $0x790] sm:$0xff]
        %v506 = vld [vmem:[#allocation2 + $0x798] sm:$0xff]
        %v507 = vld [vmem:[#allocation2 + $0x7a0] sm:$0xff]
        %v508 = vld [vmem:[#allocation2 + $0x7a8] sm:$0xff]
        %v509 = vld [vmem:[#allocation2 + $0x7b0] sm:$0xff]
        %v510 = vld [vmem:[#allocation2 + $0x7b8] sm:$0xff]
        %v511 = vld [vmem:[#allocation2 + $0x7c0] sm:$0xff]
        %v512 = vld [vmem:[#allocation2 + $0x7c8] sm:$0xff]
        %v513 = vld [vmem:[#allocation2 + $0x7d0] sm:$0xff]
        %v514 = vld [vmem:[#allocation2 + $0x7d8] sm:$0xff]
        %v515 = vld [vmem:[#allocation2 + $0x7e0] sm:$0xff]
        %v516 = vld [vmem:[#allocation2 + $0x7e8] sm:$0xff]
        %v517 = vld [vmem:[#allocation2 + $0x7f0] sm:$0xff]
        %v518 = vld [vmem:[#allocation2 + $0x7f8] sm:$0xff]
        %520 = vst [vmem:[#allocation1] ss:$2 sm:$0xff] %v261
        %v521 = vld.sshfl [vmem:[#allocation1] sm:$0xff pattern:$0x75316420]
        %v522 = vld.sshfl [vmem:[#allocation1 + $0x8] sm:$0xff pattern:$0x75316420]
        %525 = vmatpush.msra.mxu0 %v383
        %526 = vmatpush.msra.mxu0 %v375
        %527 = vmatpush.msra.mxu0 %v367
        %528 = vmatpush.msra.mxu0 %v359
        %529 = vmatpush.msra.mxu0 %v351
        %530 = vmatpush.msra.mxu0 %v343
        %531 = vmatpush.msra.mxu0 %v335
        %532 = vmatpush.msra.mxu0 %v327
        %533 = vmatpush.msra.mxu0 %v319
        %534 = vmatpush.msra.mxu0 %v311
        %535 = vmatpush.msra.mxu0 %v303
        %536 = vmatpush.msra.mxu0 %v295
        %537 = vmatpush.msra.mxu0 %v287
        %538 = vmatpush.msra.mxu0 %v279
        %539 = vmatpush.msra.mxu0 %v271
        %540 = vmatpush.msra.mxu0 %v263
        %541 = vmatmul.f32.gmra.mxu0 %v521
        %v542 = vpop.f32.mrf.mxu0
        %v543 = vadd.f32 0.0, %v542
        %544 = vdwg.mxu0
        %545 = vmatpush.msra.mxu0 %v511
        %546 = vmatpush.msra.mxu0 %v503
        %547 = vmatpush.msra.mxu0 %v495
        %548 = vmatpush.msra.mxu0 %v487
        %549 = vmatpush.msra.mxu0 %v479
        %550 = vmatpush.msra.mxu0 %v471
        %551 = vmatpush.msra.mxu0 %v463
        %552 = vmatpush.msra.mxu0 %v455
        %553 = vmatpush.msra.mxu0 %v447
        %554 = vmatpush.msra.mxu0 %v439
        %555 = vmatpush.msra.mxu0 %v431
        %556 = vmatpush.msra.mxu0 %v423
        %557 = vmatpush.msra.mxu0 %v415
        %558 = vmatpush.msra.mxu0 %v407
        %559 = vmatpush.msra.mxu0 %v399
        %560 = vmatpush.msra.mxu0 %v391
        %561 = vmatmul.f32.gmra.mxu0 %v522
        %v562 = vpop.f32.mrf.mxu0
        %v563 = vadd.f32 %v543, %v562
        %564 = vdwg.mxu0
        %565 = vmatpush.msra.mxu0 %v384
        %566 = vmatpush.msra.mxu0 %v376
        %567 = vmatpush.msra.mxu0 %v368
        %568 = vmatpush.msra.mxu0 %v360
        %569 = vmatpush.msra.mxu0 %v352
        %570 = vmatpush.msra.mxu0 %v344
        %571 = vmatpush.msra.mxu0 %v336
        %572 = vmatpush.msra.mxu0 %v328
        %573 = vmatpush.msra.mxu0 %v320
        %574 = vmatpush.msra.mxu0 %v312
        %575 = vmatpush.msra.mxu0 %v304
        %576 = vmatpush.msra.mxu0 %v296
        %577 = vmatpush.msra.mxu0 %v288
        %578 = vmatpush.msra.mxu0 %v280
        %579 = vmatpush.msra.mxu0 %v272
        %580 = vmatpush.msra.mxu0 %v264
        %581 = vmatmul.f32.gmra.mxu0 %v521
        %v582 = vpop.f32.mrf.mxu0
        %v583 = vadd.f32 0.0, %v582
        %584 = vdwg.mxu0
        %585 = vmatpush.msra.mxu0 %v512
        %586 = vmatpush.msra.mxu0 %v504
        %587 = vmatpush.msra.mxu0 %v496
        %588 = vmatpush.msra.mxu0 %v488
        %589 = vmatpush.msra.mxu0 %v480
        %590 = vmatpush.msra.mxu0 %v472
        %591 = vmatpush.msra.mxu0 %v464
        %592 = vmatpush.msra.mxu0 %v456
        %593 = vmatpush.msra.mxu0 %v448
        %594 = vmatpush.msra.mxu0 %v440
        %595 = vmatpush.msra.mxu0 %v432
        %596 = vmatpush.msra.mxu0 %v424
        %597 = vmatpush.msra.mxu0 %v416
        %598 = vmatpush.msra.mxu0 %v408
        %599 = vmatpush.msra.mxu0 %v400
        %600 = vmatpush.msra.mxu0 %v392
        %601 = vmatmul.f32.gmra.mxu0 %v522
        %v602 = vpop.f32.mrf.mxu0
        %v603 = vadd.f32 %v583, %v602
        %604 = vdwg.mxu0
        %605 = vmatpush.msra.mxu0 %v385
        %606 = vmatpush.msra.mxu0 %v377
        %607 = vmatpush.msra.mxu0 %v369
        %608 = vmatpush.msra.mxu0 %v361
        %609 = vmatpush.msra.mxu0 %v353
        %610 = vmatpush.msra.mxu0 %v345
        %611 = vmatpush.msra.mxu0 %v337
        %612 = vmatpush.msra.mxu0 %v329
        %613 = vmatpush.msra.mxu0 %v321
        %614 = vmatpush.msra.mxu0 %v313
        %615 = vmatpush.msra.mxu0 %v305
        %616 = vmatpush.msra.mxu0 %v297
        %617 = vmatpush.msra.mxu0 %v289
        %618 = vmatpush.msra.mxu0 %v281
        %619 = vmatpush.msra.mxu0 %v273
        %620 = vmatpush.msra.mxu0 %v265
        %621 = vmatmul.f32.gmra.mxu0 %v521
        %v622 = vpop.f32.mrf.mxu0
        %v623 = vadd.f32 0.0, %v622
        %624 = vdwg.mxu0
        %625 = vmatpush.msra.mxu0 %v513
        %626 = vmatpush.msra.mxu0 %v505
        %627 = vmatpush.msra.mxu0 %v497
        %628 = vmatpush.msra.mxu0 %v489
        %629 = vmatpush.msra.mxu0 %v481
        %630 = vmatpush.msra.mxu0 %v473
        %631 = vmatpush.msra.mxu0 %v465
        %632 = vmatpush.msra.mxu0 %v457
        %633 = vmatpush.msra.mxu0 %v449
        %634 = vmatpush.msra.mxu0 %v441
        %635 = vmatpush.msra.mxu0 %v433
        %636 = vmatpush.msra.mxu0 %v425
        %637 = vmatpush.msra.mxu0 %v417
        %638 = vmatpush.msra.mxu0 %v409
        %639 = vmatpush.msra.mxu0 %v401
        %640 = vmatpush.msra.mxu0 %v393
        %641 = vmatmul.f32.gmra.mxu0 %v522
        %v642 = vpop.f32.mrf.mxu0
        %v643 = vadd.f32 %v623, %v642
        %644 = vdwg.mxu0
        %645 = vmatpush.msra.mxu0 %v386
        %646 = vmatpush.msra.mxu0 %v378
        %647 = vmatpush.msra.mxu0 %v370
        %648 = vmatpush.msra.mxu0 %v362
        %649 = vmatpush.msra.mxu0 %v354
        %650 = vmatpush.msra.mxu0 %v346
        %651 = vmatpush.msra.mxu0 %v338
        %652 = vmatpush.msra.mxu0 %v330
        %653 = vmatpush.msra.mxu0 %v322
        %654 = vmatpush.msra.mxu0 %v314
        %655 = vmatpush.msra.mxu0 %v306
        %656 = vmatpush.msra.mxu0 %v298
        %657 = vmatpush.msra.mxu0 %v290
        %658 = vmatpush.msra.mxu0 %v282
        %659 = vmatpush.msra.mxu0 %v274
        %660 = vmatpush.msra.mxu0 %v266
        %661 = vmatmul.f32.gmra.mxu0 %v521
        %v662 = vpop.f32.mrf.mxu0
        %v663 = vadd.f32 0.0, %v662
        %664 = vdwg.mxu0
        %665 = vmatpush.msra.mxu0 %v514
        %666 = vmatpush.msra.mxu0 %v506
        %667 = vmatpush.msra.mxu0 %v498
        %668 = vmatpush.msra.mxu0 %v490
        %669 = vmatpush.msra.mxu0 %v482
        %670 = vmatpush.msra.mxu0 %v474
        %671 = vmatpush.msra.mxu0 %v466
        %672 = vmatpush.msra.mxu0 %v458
        %673 = vmatpush.msra.mxu0 %v450
        %674 = vmatpush.msra.mxu0 %v442
        %675 = vmatpush.msra.mxu0 %v434
        %676 = vmatpush.msra.mxu0 %v426
        %677 = vmatpush.msra.mxu0 %v418
        %678 = vmatpush.msra.mxu0 %v410
        %679 = vmatpush.msra.mxu0 %v402
        %680 = vmatpush.msra.mxu0 %v394
        %681 = vmatmul.f32.gmra.mxu0 %v522
        %v682 = vpop.f32.mrf.mxu0
        %v683 = vadd.f32 %v663, %v682
        %684 = vdwg.mxu0
        %685 = vmatpush.msra.mxu0 %v387
        %686 = vmatpush.msra.mxu0 %v379
        %687 = vmatpush.msra.mxu0 %v371
        %688 = vmatpush.msra.mxu0 %v363
        %689 = vmatpush.msra.mxu0 %v355
        %690 = vmatpush.msra.mxu0 %v347
        %691 = vmatpush.msra.mxu0 %v339
        %692 = vmatpush.msra.mxu0 %v331
        %693 = vmatpush.msra.mxu0 %v323
        %694 = vmatpush.msra.mxu0 %v315
        %695 = vmatpush.msra.mxu0 %v307
        %696 = vmatpush.msra.mxu0 %v299
        %697 = vmatpush.msra.mxu0 %v291
        %698 = vmatpush.msra.mxu0 %v283
        %699 = vmatpush.msra.mxu0 %v275
        %700 = vmatpush.msra.mxu0 %v267
        %701 = vmatmul.f32.gmra.mxu0 %v521
        %v702 = vpop.f32.mrf.mxu0
        %v703 = vadd.f32 0.0, %v702
        %704 = vdwg.mxu0
        %705 = vmatpush.msra.mxu0 %v515
        %706 = vmatpush.msra.mxu0 %v507
        %707 = vmatpush.msra.mxu0 %v499
        %708 = vmatpush.msra.mxu0 %v491
        %709 = vmatpush.msra.mxu0 %v483
        %710 = vmatpush.msra.mxu0 %v475
        %711 = vmatpush.msra.mxu0 %v467
        %712 = vmatpush.msra.mxu0 %v459
        %713 = vmatpush.msra.mxu0 %v451
        %714 = vmatpush.msra.mxu0 %v443
        %715 = vmatpush.msra.mxu0 %v435
        %716 = vmatpush.msra.mxu0 %v427
        %717 = vmatpush.msra.mxu0 %v419
        %718 = vmatpush.msra.mxu0 %v411
        %719 = vmatpush.msra.mxu0 %v403
        %720 = vmatpush.msra.mxu0 %v395
        %721 = vmatmul.f32.gmra.mxu0 %v522
        %v722 = vpop.f32.mrf.mxu0
        %v723 = vadd.f32 %v703, %v722
        %724 = vdwg.mxu0
        %725 = vmatpush.msra.mxu0 %v388
        %726 = vmatpush.msra.mxu0 %v380
        %727 = vmatpush.msra.mxu0 %v372
        %728 = vmatpush.msra.mxu0 %v364
        %729 = vmatpush.msra.mxu0 %v356
        %730 = vmatpush.msra.mxu0 %v348
        %731 = vmatpush.msra.mxu0 %v340
        %732 = vmatpush.msra.mxu0 %v332
        %733 = vmatpush.msra.mxu0 %v324
        %734 = vmatpush.msra.mxu0 %v316
        %735 = vmatpush.msra.mxu0 %v308
        %736 = vmatpush.msra.mxu0 %v300
        %737 = vmatpush.msra.mxu0 %v292
        %738 = vmatpush.msra.mxu0 %v284
        %739 = vmatpush.msra.mxu0 %v276
        %740 = vmatpush.msra.mxu0 %v268
        %741 = vmatmul.f32.gmra.mxu0 %v521
        %v742 = vpop.f32.mrf.mxu0
        %v743 = vadd.f32 0.0, %v742
        %744 = vdwg.mxu0
        %745 = vmatpush.msra.mxu0 %v516
        %746 = vmatpush.msra.mxu0 %v508
        %747 = vmatpush.msra.mxu0 %v500
        %748 = vmatpush.msra.mxu0 %v492
        %749 = vmatpush.msra.mxu0 %v484
        %750 = vmatpush.msra.mxu0 %v476
        %751 = vmatpush.msra.mxu0 %v468
        %752 = vmatpush.msra.mxu0 %v460
        %753 = vmatpush.msra.mxu0 %v452
        %754 = vmatpush.msra.mxu0 %v444
        %755 = vmatpush.msra.mxu0 %v436
        %756 = vmatpush.msra.mxu0 %v428
        %757 = vmatpush.msra.mxu0 %v420
        %758 = vmatpush.msra.mxu0 %v412
        %759 = vmatpush.msra.mxu0 %v404
        %760 = vmatpush.msra.mxu0 %v396
        %761 = vmatmul.f32.gmra.mxu0 %v522
        %v762 = vpop.f32.mrf.mxu0
        %v763 = vadd.f32 %v743, %v762
        %764 = vdwg.mxu0
        %765 = vmatpush.msra.mxu0 %v389
        %766 = vmatpush.msra.mxu0 %v381
        %767 = vmatpush.msra.mxu0 %v373
        %768 = vmatpush.msra.mxu0 %v365
        %769 = vmatpush.msra.mxu0 %v357
        %770 = vmatpush.msra.mxu0 %v349
        %771 = vmatpush.msra.mxu0 %v341
        %772 = vmatpush.msra.mxu0 %v333
        %773 = vmatpush.msra.mxu0 %v325
        %774 = vmatpush.msra.mxu0 %v317
        %775 = vmatpush.msra.mxu0 %v309
        %776 = vmatpush.msra.mxu0 %v301
        %777 = vmatpush.msra.mxu0 %v293
        %778 = vmatpush.msra.mxu0 %v285
        %779 = vmatpush.msra.mxu0 %v277
        %780 = vmatpush.msra.mxu0 %v269
        %781 = vmatmul.f32.gmra.mxu0 %v521
        %v782 = vpop.f32.mrf.mxu0
        %v783 = vadd.f32 0.0, %v782
        %784 = vdwg.mxu0
        %785 = vmatpush.msra.mxu0 %v517
        %786 = vmatpush.msra.mxu0 %v509
        %787 = vmatpush.msra.mxu0 %v501
        %788 = vmatpush.msra.mxu0 %v493
        %789 = vmatpush.msra.mxu0 %v485
        %790 = vmatpush.msra.mxu0 %v477
        %791 = vmatpush.msra.mxu0 %v469
        %792 = vmatpush.msra.mxu0 %v461
        %793 = vmatpush.msra.mxu0 %v453
        %794 = vmatpush.msra.mxu0 %v445
        %795 = vmatpush.msra.mxu0 %v437
        %796 = vmatpush.msra.mxu0 %v429
        %797 = vmatpush.msra.mxu0 %v421
        %798 = vmatpush.msra.mxu0 %v413
        %799 = vmatpush.msra.mxu0 %v405
        %800 = vmatpush.msra.mxu0 %v397
        %801 = vmatmul.f32.gmra.mxu0 %v522
        %v802 = vpop.f32.mrf.mxu0
        %v803 = vadd.f32 %v783, %v802
        %804 = vdwg.mxu0
        %805 = vmatpush.msra.mxu0 %v390
        %806 = vmatpush.msra.mxu0 %v382
        %807 = vmatpush.msra.mxu0 %v374
        %808 = vmatpush.msra.mxu0 %v366
        %809 = vmatpush.msra.mxu0 %v358
        %810 = vmatpush.msra.mxu0 %v350
        %811 = vmatpush.msra.mxu0 %v342
        %812 = vmatpush.msra.mxu0 %v334
        %813 = vmatpush.msra.mxu0 %v326
        %814 = vmatpush.msra.mxu0 %v318
        %815 = vmatpush.msra.mxu0 %v310
        %816 = vmatpush.msra.mxu0 %v302
        %817 = vmatpush.msra.mxu0 %v294
        %818 = vmatpush.msra.mxu0 %v286
        %819 = vmatpush.msra.mxu0 %v278
        %820 = vmatpush.msra.mxu0 %v270
        %821 = vmatmul.f32.gmra.mxu0 %v521
        %v822 = vpop.f32.mrf.mxu0
        %v823 = vadd.f32 0.0, %v822
        %824 = vdwg.mxu0
        %825 = vmatpush.msra.mxu0 %v518
        %826 = vmatpush.msra.mxu0 %v510
        %827 = vmatpush.msra.mxu0 %v502
        %828 = vmatpush.msra.mxu0 %v494
        %829 = vmatpush.msra.mxu0 %v486
        %830 = vmatpush.msra.mxu0 %v478
        %831 = vmatpush.msra.mxu0 %v470
        %832 = vmatpush.msra.mxu0 %v462
        %833 = vmatpush.msra.mxu0 %v454
        %834 = vmatpush.msra.mxu0 %v446
        %835 = vmatpush.msra.mxu0 %v438
        %836 = vmatpush.msra.mxu0 %v430
        %837 = vmatpush.msra.mxu0 %v422
        %838 = vmatpush.msra.mxu0 %v414
        %839 = vmatpush.msra.mxu0 %v406
        %840 = vmatpush.msra.mxu0 %v398
        %841 = vmatmul.f32.gmra.mxu0 %v522
        %v842 = vpop.f32.mrf.mxu0
        %v843 = vadd.f32 %v823, %v842
        %844 = vdwg.mxu0
        %v845 = vld [vmem:[%s260] sm:$0xff]
        %847 = vset.pattern.permute.xlu0 0
        %848 = vperm.xlu0 %847, %v845
        %v849 = vpop.permute.xlu0 %848
        %vm851 = vcmask 31744
        %v853 = vsel %vm851, %v262, 0
        %vm855 = vcmask 1043456
        %v857 = vsel %vm855, %v563, 0
        %v860 = vsel %vm855, %v603, 0
        %v863 = vsel %vm855, %v643, 0
        %v866 = vsel %vm855, %v683, 0
        %v869 = vsel %vm855, %v723, 0
        %v872 = vsel %vm855, %v763, 0
        %v875 = vsel %vm855, %v803, 0
        %v878 = vsel %vm855, %v843, 0
        %880 = vmatpush.msra.mxu0 0.0
        %881 = vmatpush.msra.mxu0 0.0
        %882 = vmatpush.msra.mxu0 0.0
        %883 = vmatpush.msra.mxu0 0.0
        %884 = vmatpush.msra.mxu0 0.0
        %885 = vmatpush.msra.mxu0 0.0
        %886 = vmatpush.msra.mxu0 0.0
        %887 = vmatpush.msra.mxu0 0.0
        %888 = vmatpush.msra.mxu0 0.0
        %889 = vmatpush.msra.mxu0 0.0
        %890 = vmatpush.msra.mxu0 0.0
        %891 = vmatpush.msra.mxu0 0.0
        %892 = vmatpush.msra.mxu0 0.0
        %893 = vmatpush.msra.mxu0 0.0
        %894 = vmatpush.msra.mxu0 0.0
        %895 = vmatpush.msra.mxu0 %v857
        %896 = vmatmul.f32.gmra.mxu0 %v853
        %v897 = vpop.f32.mrf.mxu0
        %v898 = vadd.f32 %v849, %v897
        %899 = vdwg.mxu0
        %900 = vmatpush.msra.mxu0 0.0
        %901 = vmatpush.msra.mxu0 0.0
        %902 = vmatpush.msra.mxu0 0.0
        %903 = vmatpush.msra.mxu0 0.0
        %904 = vmatpush.msra.mxu0 0.0
        %905 = vmatpush.msra.mxu0 0.0
        %906 = vmatpush.msra.mxu0 0.0
        %907 = vmatpush.msra.mxu0 0.0
        %908 = vmatpush.msra.mxu0 0.0
        %909 = vmatpush.msra.mxu0 0.0
        %910 = vmatpush.msra.mxu0 0.0
        %911 = vmatpush.msra.mxu0 0.0
        %912 = vmatpush.msra.mxu0 0.0
        %913 = vmatpush.msra.mxu0 0.0
        %914 = vmatpush.msra.mxu0 0.0
        %915 = vmatpush.msra.mxu0 %v860
        %916 = vmatmul.f32.gmra.mxu0 %v853
        %v917 = vpop.f32.mrf.mxu0
        %v918 = vadd.f32 %v849, %v917
        %919 = vdwg.mxu0
        %920 = vmatpush.msra.mxu0 0.0
        %921 = vmatpush.msra.mxu0 0.0
        %922 = vmatpush.msra.mxu0 0.0
        %923 = vmatpush.msra.mxu0 0.0
        %924 = vmatpush.msra.mxu0 0.0
        %925 = vmatpush.msra.mxu0 0.0
        %926 = vmatpush.msra.mxu0 0.0
        %927 = vmatpush.msra.mxu0 0.0
        %928 = vmatpush.msra.mxu0 0.0
        %929 = vmatpush.msra.mxu0 0.0
        %930 = vmatpush.msra.mxu0 0.0
        %931 = vmatpush.msra.mxu0 0.0
        %932 = vmatpush.msra.mxu0 0.0
        %933 = vmatpush.msra.mxu0 0.0
        %934 = vmatpush.msra.mxu0 0.0
        %935 = vmatpush.msra.mxu0 %v863
        %936 = vmatmul.f32.gmra.mxu0 %v853
        %v937 = vpop.f32.mrf.mxu0
        %v938 = vadd.f32 %v849, %v937
        %939 = vdwg.mxu0
        %940 = vmatpush.msra.mxu0 0.0
        %941 = vmatpush.msra.mxu0 0.0
        %942 = vmatpush.msra.mxu0 0.0
        %943 = vmatpush.msra.mxu0 0.0
        %944 = vmatpush.msra.mxu0 0.0
        %945 = vmatpush.msra.mxu0 0.0
        %946 = vmatpush.msra.mxu0 0.0
        %947 = vmatpush.msra.mxu0 0.0
        %948 = vmatpush.msra.mxu0 0.0
        %949 = vmatpush.msra.mxu0 0.0
        %950 = vmatpush.msra.mxu0 0.0
        %951 = vmatpush.msra.mxu0 0.0
        %952 = vmatpush.msra.mxu0 0.0
        %953 = vmatpush.msra.mxu0 0.0
        %954 = vmatpush.msra.mxu0 0.0
        %955 = vmatpush.msra.mxu0 %v866
        %956 = vmatmul.f32.gmra.mxu0 %v853
        %v957 = vpop.f32.mrf.mxu0
        %v958 = vadd.f32 %v849, %v957
        %959 = vdwg.mxu0
        %960 = vmatpush.msra.mxu0 0.0
        %961 = vmatpush.msra.mxu0 0.0
        %962 = vmatpush.msra.mxu0 0.0
        %963 = vmatpush.msra.mxu0 0.0
        %964 = vmatpush.msra.mxu0 0.0
        %965 = vmatpush.msra.mxu0 0.0
        %966 = vmatpush.msra.mxu0 0.0
        %967 = vmatpush.msra.mxu0 0.0
        %968 = vmatpush.msra.mxu0 0.0
        %969 = vmatpush.msra.mxu0 0.0
        %970 = vmatpush.msra.mxu0 0.0
        %971 = vmatpush.msra.mxu0 0.0
        %972 = vmatpush.msra.mxu0 0.0
        %973 = vmatpush.msra.mxu0 0.0
        %974 = vmatpush.msra.mxu0 0.0
        %975 = vmatpush.msra.mxu0 %v869
        %976 = vmatmul.f32.gmra.mxu0 %v853
        %v977 = vpop.f32.mrf.mxu0
        %v978 = vadd.f32 %v849, %v977
        %979 = vdwg.mxu0
        %980 = vmatpush.msra.mxu0 0.0
        %981 = vmatpush.msra.mxu0 0.0
        %982 = vmatpush.msra.mxu0 0.0
        %983 = vmatpush.msra.mxu0 0.0
        %984 = vmatpush.msra.mxu0 0.0
        %985 = vmatpush.msra.mxu0 0.0
        %986 = vmatpush.msra.mxu0 0.0
        %987 = vmatpush.msra.mxu0 0.0
        %988 = vmatpush.msra.mxu0 0.0
        %989 = vmatpush.msra.mxu0 0.0
        %990 = vmatpush.msra.mxu0 0.0
        %991 = vmatpush.msra.mxu0 0.0
        %992 = vmatpush.msra.mxu0 0.0
        %993 = vmatpush.msra.mxu0 0.0
        %994 = vmatpush.msra.mxu0 0.0
        %995 = vmatpush.msra.mxu0 %v872
        %996 = vmatmul.f32.gmra.mxu0 %v853
        %v997 = vpop.f32.mrf.mxu0
        %v998 = vadd.f32 %v849, %v997
        %999 = vdwg.mxu0
        %1000 = vmatpush.msra.mxu0 0.0
        %1001 = vmatpush.msra.mxu0 0.0
        %1002 = vmatpush.msra.mxu0 0.0
        %1003 = vmatpush.msra.mxu0 0.0
        %1004 = vmatpush.msra.mxu0 0.0
        %1005 = vmatpush.msra.mxu0 0.0
        %1006 = vmatpush.msra.mxu0 0.0
        %1007 = vmatpush.msra.mxu0 0.0
        %1008 = vmatpush.msra.mxu0 0.0
        %1009 = vmatpush.msra.mxu0 0.0
        %1010 = vmatpush.msra.mxu0 0.0
        %1011 = vmatpush.msra.mxu0 0.0
        %1012 = vmatpush.msra.mxu0 0.0
        %1013 = vmatpush.msra.mxu0 0.0
        %1014 = vmatpush.msra.mxu0 0.0
        %1015 = vmatpush.msra.mxu0 %v875
        %1016 = vmatmul.f32.gmra.mxu0 %v853
        %v1017 = vpop.f32.mrf.mxu0
        %v1018 = vadd.f32 %v849, %v1017
        %1019 = vdwg.mxu0
        %1020 = vmatpush.msra.mxu0 0.0
        %1021 = vmatpush.msra.mxu0 0.0
        %1022 = vmatpush.msra.mxu0 0.0
        %1023 = vmatpush.msra.mxu0 0.0
        %1024 = vmatpush.msra.mxu0 0.0
        %1025 = vmatpush.msra.mxu0 0.0
        %1026 = vmatpush.msra.mxu0 0.0
        %1027 = vmatpush.msra.mxu0 0.0
        %1028 = vmatpush.msra.mxu0 0.0
        %1029 = vmatpush.msra.mxu0 0.0
        %1030 = vmatpush.msra.mxu0 0.0
        %1031 = vmatpush.msra.mxu0 0.0
        %1032 = vmatpush.msra.mxu0 0.0
        %1033 = vmatpush.msra.mxu0 0.0
        %1034 = vmatpush.msra.mxu0 0.0
        %1035 = vmatpush.msra.mxu0 %v878
        %1036 = vmatmul.f32.gmra.mxu0 %v853
        %v1037 = vpop.f32.mrf.mxu0
        %v1038 = vadd.f32 %v849, %v1037
        %1039 = vdwg.mxu0
        %1040 = vst [vmem:[%s247] sm:$0xff] %v898
        %1041 = vst [vmem:[%s247 + $0x8] sm:$0xff] %v918
        %1042 = vst [vmem:[%s247 + $0x10] sm:$0xff] %v938
        %1043 = vst [vmem:[%s247 + $0x18] sm:$0xff] %v958
        %1044 = vst [vmem:[%s247 + $0x20] sm:$0xff] %v978
        %1045 = vst [vmem:[%s247 + $0x28] sm:$0xff] %v998
        %1046 = vst [vmem:[%s247 + $0x30] sm:$0xff] %v1018
        %1047 = vst [vmem:[%s247 + $0x38] sm:$0xff] %v1038
        %s1048 = sand.u32 %s140, 1
        %s1049 = scalar_lea.sflag [#allocation4], %s1048
        %s1050 = sand.u32 %s140, 1
        %s1051 = smul.addr %s1050, 64
        %s1052 = scalar_lea.vmem [#allocation5], %s1051
        // Predicated region
        $region41: #{tpu_custom_call.1} parent=35 // pred_check
          %p1053 = pneg %p150
        $region42: #{tpu_custom_call.1} parent=35 // pred_check_branch
          %1055 = sbr.rel (%p1053) target = $region44
        $region43: #{tpu_custom_call.1} parent=35 // pred_region
          %1057 = vsyncadd %s1049, 0
          %s1058 = smul.addr %s24, 8
          %s1059 = smul.addr %s23, 8
          %s1060 = sadd.s32 %s1058, %s1059
          %s1061 = smul.addr %s1060, 8
          %s1062 = scalar_lea.hbm %s4, %s1061
          %s1064 = sshll.u32 %s1052, 4
          %s1065 = int_to_ptr.vmem [resolvable:$true] %s1064
          %s1066 = sshll.u32 %s1062, 4
          %s1067 = int_to_ptr.hbm [resolvable:$true] %s1066
          %1069 = dma.vmem_to_hbm [thread:$0]  %s1065, 1024, %s1067, %s1049
        $region44: #{tpu_custom_call.1} parent=35 // pred_fallthru
          _
      $region36: #{tpu_custom_call.1} parent=5 // pred_fallthru
        _
      %p1070 = scmp.le.s32.totalorder 2, %s14
      // Predicated region
      $region45: #{tpu_custom_call.1} parent=5 // pred_check
        %p1071 = pneg %p1070
      $region46: #{tpu_custom_call.1} parent=5 // pred_check_branch
        %1073 = sbr.rel (%p1071) target = $region48
      $region47: #{tpu_custom_call.1} parent=5 // pred_region
        %s1074 = ssub.s32 %s14, 2
        // Predicated region
        $region49: #{tpu_custom_call.1} parent=47 // pred_check
          %p1075 = pneg %p156
        $region50: #{tpu_custom_call.1} parent=47 // pred_check_branch
          %1077 = sbr.rel (%p1075) target = $region52
        $region51: #{tpu_custom_call.1} parent=47 // pred_region
          %s1078 = sand.u32 %s141, 1
          %s1079 = scalar_lea.sflag [#allocation4], %s1078
          %s1080 = sand.u32 %s141, 1
          %s1081 = smul.addr %s1080, 64
          %s1082 = scalar_lea.vmem [#allocation5], %s1081
          %1084 = dma.done %s1079, 1024
        $region52: #{tpu_custom_call.1} parent=47 // pred_fallthru
          _
      $region48: #{tpu_custom_call.1} parent=5 // pred_fallthru
        _
    $region6: #{tpu_custom_call.1} parent=1 // loop_footer
      %s18 = sadd.s32 1, %s14
    $region7: #{tpu_custom_call.1} parent=1 // loop_footer_branch
      %13 = sbr.rel target = $region3
    $region8: #{tpu_custom_call.1} parent=1 // loop_exit
      _
    %1085 = vsyncpa [#allocation3], 1
    %s1086 = scalar_lea.sflag [#allocation3], 1
    %1087 = vsyncpa %s1086, 1
    %1088 = vsyncpa [#allocation4], 1
    %s1089 = scalar_lea.sflag [#allocation4], 1
    %1090 = vsyncpa %s1089, 1

</llo_original>
